<compile_context>
chip_gen: v6e
topology: v6e:2x2x1
jax: 0.10.0
libtpu: 0.0.40
codegen_flags: <defaults>
</compile_context>

<pallas_src>
from functools import partial

import jax
import jax.numpy as jnp
from jax.experimental import pallas as pl
from jax.experimental.pallas import tpu as pltpu

IN_DIM = 16
FEATURES = (128, 128, 128, 128)
FEAT = FEATURES[0]
OUT_DIM = 2
N_SLAB = 8          # 7 block weights (128x128) + padded head weight
TB_MAX = 1024       # max batch rows per grid step; VMEM stays ~2 MiB/step

_F32 = jnp.float32
_BF16 = jnp.bfloat16


def _round_up(n, m):
    return ((n + m - 1) // m) * m


def _num_tensorcores():
    """Best-effort TensorCore count (v7x has 2/chip). Safe fallback: 1."""
    try:
        info = pltpu.get_tpu_info()
        for attr in ("num_cores", "core_count", "num_tensorcores",
                     "tensorcores_per_chip"):
            v = getattr(info, attr, None)
            if isinstance(v, int) and v > 0:
                return v
    except Exception:
        pass
    return 1


def _pick_batch_tile(batch, num_cores=1, tb_max=TB_MAX):
    """Largest tile with sublanes a multiple of 8.  Only forces multiple grid
    steps when there is more than one TensorCore AND enough rows to split."""
    bp = _round_up(max(batch, 1), 8)
    min_tiles = max(1, min(num_cores, bp // 8))
    n_tiles = max(min_tiles, pl.cdiv(bp, tb_max))
    return min(tb_max, _round_up(pl.cdiv(bp, n_tiles), 8))


def hook_phynet_kernel(x_ref, w0_ref, ws_ref, b_ref, out_ref):
    # x_ref : (tb, in_dim) f32
    # w0_ref: (in_dim, 2*FEAT) bf16   fused block-0 [Linear1 | shortcut]
    # ws_ref: (FEAT, 8*FEAT) bf16     [blk0 L2 | blk1 L1 | blk1 L2 | ... | head(pad)]
    # b_ref : (10, FEAT) f32          packed biases (head bias zero-padded)
    # out_ref:(tb, FEAT) f32          lane-dense output slab; cols [:2] are real
    h = x_ref[...].astype(_BF16)

    # ---- ResBlockFC 0 (Linear shortcut), one 256-lane MXU pass ----
    pre = jnp.dot(h, w0_ref[...], preferred_element_type=_F32)       # (tb, 2F)
    y = jnp.maximum(pre[:, :FEAT] + b_ref[0:1, :], 0.0)              # ReLU(L1)
    z = pre[:, FEAT:] + b_ref[1:2, :]                                # shortcut
    y = jnp.dot(y.astype(_BF16), ws_ref[:, 0:FEAT],
                preferred_element_type=_F32) + b_ref[2:3, :]         # Linear2
    h = jnp.maximum(y + z, 0.0)

    # ---- ResBlockFC 1..3 (identity shortcut) ----
    for blk in range(3):
        c1 = (1 + 2 * blk) * FEAT
        c2 = (2 + 2 * blk) * FEAT
        r1 = 3 + 2 * blk
        r2 = 4 + 2 * blk
        y = jnp.dot(h.astype(_BF16), ws_ref[:, c1:c1 + FEAT],
                    preferred_element_type=_F32) + b_ref[r1:r1 + 1, :]
        y = jnp.maximum(y, 0.0)
        y = jnp.dot(y.astype(_BF16), ws_ref[:, c2:c2 + FEAT],
                    preferred_element_type=_F32) + b_ref[r2:r2 + 1, :]
        h = jnp.maximum(y + h, 0.0)

    # ---- fit head (zero-padded to 128 lanes) + abs ----
    out = jnp.dot(h.astype(_BF16), ws_ref[:, 7 * FEAT:8 * FEAT],
                  preferred_element_type=_F32)
    out_ref[...] = jnp.abs(out + b_ref[9:10, :]).astype(out_ref.dtype)


def pack_params(params):
    """Raw f32 params ((in,out) weights / (1,out) biases) -> prepacked operands.
    Call ONCE; reuse the result for every forward call."""
    p = list(params)
    w1_0, b1_0, w2_0, b2_0, ws_0, bs_0 = p[:6]
    rest = p[6:]

    w0 = jnp.concatenate([w1_0, ws_0], axis=1).astype(_BF16)         # (in, 2F)

    slab_ws = [w2_0]
    biases = [b1_0, bs_0, b2_0]
    idx = 0
    for _ in range(len(FEATURES) - 1):
        w1, b1, w2, b2 = rest[idx:idx + 4]
        idx += 4
        slab_ws += [w1, w2]
        biases += [b1, b2]
    wf, bf = rest[idx], rest[idx + 1]
    slab_ws.append(jnp.pad(wf, ((0, 0), (0, FEAT - wf.shape[1]))))   # pad head
    biases.append(jnp.pad(bf, ((0, 0), (0, FEAT - bf.shape[1]))))

    w_slab = jnp.concatenate(slab_ws, axis=1).astype(_BF16)          # (F, 8F)
    bias_pack = jnp.concatenate(biases, axis=0).astype(_F32)         # (10, F)
    return w0, w_slab, bias_pack


@partial(jax.jit, static_argnames=("num_cores",))
def hook_phynet_forward(x, w0, w_slab, bias_pack, *, num_cores=1):
    batch, in_dim = x.shape

    tb = _pick_batch_tile(batch, num_cores)
    grid_b = pl.cdiv(batch, tb)
    padded = grid_b * tb
    if padded != batch:
        x = jnp.pad(x, ((0, padded - batch), (0, 0)))

    full = lambda a: pl.BlockSpec(a.shape, lambda i: (0,) * a.ndim)
    in_specs = [
        pl.BlockSpec((tb, in_dim), lambda i: (i, 0)),
        full(w0),
        full(w_slab),
        full(bias_pack),
    ]
    out_specs = pl.BlockSpec((tb, FEAT), lambda i: (i, 0))

    flops_per_row = (
        2 * in_dim * (2 * FEAT)                           # fused block-0 dot
        + 2 * FEAT * FEAT                                 # block-0 Linear2
        + (len(FEATURES) - 1) * 2 * (2 * FEAT * FEAT)     # blocks 1..3
        + 2 * FEAT * FEAT                                 # padded head
    )
    weight_bytes = sum(a.size * a.dtype.itemsize for a in (w0, w_slab, bias_pack))
    cost = pl.CostEstimate(
        flops=int(padded * flops_per_row),
        transcendentals=0,
        bytes_accessed=int(padded * (in_dim * 4 + FEAT * 4) + weight_bytes),
    )

    out = pl.pallas_call(
        hook_phynet_kernel,
        out_shape=jax.ShapeDtypeStruct((padded, FEAT), jnp.float32),
        grid=(grid_b,),
        in_specs=in_specs,
        out_specs=out_specs,
        compiler_params=pltpu.CompilerParams(
            dimension_semantics=("parallel",),
        ),
        cost_estimate=cost,
    )(x, w0, w_slab, bias_pack)
    return out[:batch, :OUT_DIM]


def init_params(key, in_dim=IN_DIM, features=FEATURES, out_dim=OUT_DIM):
    """Deterministic synthetic init. Weights stored as (in, out); biases (1, out)."""
    params = []
    keys = iter(jax.random.split(key, 64))

    def lin(fan_in, fan_out, kaiming=False):
        kw, kb = next(keys), next(keys)
        if kaiming:
            bound_w = (6.0 / fan_in) ** 0.5        # kaiming_uniform_, a=0
        else:
            bound_w = 1.0 / (fan_in ** 0.5)        # PyTorch Linear default
        bound_b = 1.0 / (fan_in ** 0.5)
        w = jax.random.uniform(kw, (fan_in, fan_out), jnp.float32, -bound_w, bound_w)
        b = jax.random.uniform(kb, (1, fan_out), jnp.float32, -bound_b, bound_b)
        return w, b

    pre = in_dim
    for i, cur in enumerate(features):
        w1, b1 = lin(pre, cur)
        w2, b2 = lin(cur, cur)
        params += [w1, b1, w2, b2]
        if i == 0:
            ws, bs = lin(pre, cur)          # Linear shortcut (pre != cur)
            params += [ws, bs]
        pre = cur
    wf, bf = lin(features[-1], out_dim, kaiming=True)  # only `fit` got kaiming init
    params += [wf, bf]
    return params


def reference_forward(x, params, matmul_dtype=_BF16):
    """Pure-JAX reference. matmul_dtype=_BF16 matches the kernel's MXU dtype;
    matmul_dtype=_F32 gives the true f32 PyTorch semantics (for drift check)."""
    def lin(h, w, b):
        return jnp.dot(h.astype(matmul_dtype), w.astype(matmul_dtype),
                       preferred_element_type=_F32) + b

    p = list(params)
    h = x.astype(_F32)
    w1, b1, w2, b2, ws, bs = p[:6]
    y = lin(jnp.maximum(lin(h, w1, b1), 0.0), w2, b2)
    z = lin(h, ws, bs)
    h = jnp.maximum(y + z, 0.0)
    idx = 6
    for _ in range(len(FEATURES) - 1):
        w1, b1, w2, b2 = p[idx:idx + 4]
        idx += 4
        y = lin(jnp.maximum(lin(h, w1, b1), 0.0), w2, b2)
        h = jnp.maximum(y + h, 0.0)
    wf, bf = p[idx], p[idx + 1]
    return jnp.abs(lin(h, wf, bf))


# TODO(synk): ema_update (teacher EMA of parameters) is a training-time helper,
# not part of the forward pass, so it is not implemented as a kernel.

if __name__ == "__main__":
    key = jax.random.PRNGKey(0)
    kx, kp = jax.random.split(key)

    B = 20  # deliberately NOT a multiple of 8: exercises the pad path
    x = jax.random.normal(kx, (B, IN_DIM), jnp.float32)
    params = init_params(kp)

    # Pack once (outside the per-call forward); reuse for every call.
    packed = pack_params(params)
    n_cores = _num_tensorcores()

    out = jax.block_until_ready(hook_phynet_forward(x, *packed, num_cores=n_cores))
    ref_bf16 = reference_forward(x, params, matmul_dtype=_BF16)
    ref_f32 = reference_forward(x, params, matmul_dtype=_F32)

    assert out.shape == (B, OUT_DIM), out.shape
    max_err = float(jnp.max(jnp.abs(out - ref_bf16)))
    assert jnp.allclose(out, ref_bf16, atol=1e-3, rtol=1e-3), max_err
    # Informational: drift of the bf16-MXU kernel vs. the true f32 model.
    _drift = float(jnp.max(jnp.abs(out - ref_f32)))
    print("KERNEL_OK")
</pallas_src>

<mosaic_0001>
module attributes {stable_mosaic.version = 11 : i64} {
  func.func @hook_phynet_kernel(%arg0: i32, %arg1: memref<24x16xf32, #tpu.memory_space<vmem>>, %arg2: memref<16x256xbf16, #tpu.memory_space<vmem>>, %arg3: memref<128x1024xbf16, #tpu.memory_space<vmem>>, %arg4: memref<10x128xf32, #tpu.memory_space<vmem>>, %arg5: memref<24x128xf32, #tpu.memory_space<vmem>>) attributes {dimension_semantics = [#tpu.dimension_semantics<parallel>], iteration_bounds = array<i64: 1>, scalar_prefetch = 0 : i64, scratch_operands = 0 : i64, tpu.core_type = #tpu.core_type<tc>, window_params = [{transform_indices = @transform_0, window_bounds = array<i64: 24, 16>}, {pipeline_mode = #tpu.pipeline_mode<synchronous>, transform_indices = @transform_1, window_bounds = array<i64: 16, 256>}, {pipeline_mode = #tpu.pipeline_mode<synchronous>, transform_indices = @transform_2, window_bounds = array<i64: 128, 1024>}, {pipeline_mode = #tpu.pipeline_mode<synchronous>, transform_indices = @transform_3, window_bounds = array<i64: 10, 128>}, {transform_indices = @transform_4, window_bounds = array<i64: 24, 128>}]} {
    %c0 = arith.constant 0 : index
    %c0_0 = arith.constant 0 : index
    %0 = vector.load %arg1[%c0, %c0_0] : memref<24x16xf32, #tpu.memory_space<vmem>>, vector<24x16xf32>
    %1 = arith.truncf %0 : vector<24x16xf32> to vector<24x16xbf16>
    %c0_1 = arith.constant 0 : index
    %c0_2 = arith.constant 0 : index
    %2 = vector.load %arg2[%c0_1, %c0_2] : memref<16x256xbf16, #tpu.memory_space<vmem>>, vector<16x256xbf16>
    %cst = arith.constant dense<0.000000e+00> : vector<24x256xf32>
    %3 = tpu.matmul %1, %2, %cst {dimension_numbers = #tpu.dot_dimension_numbers<[1], [0], [0], [1], [0, 0, 1, 1], [], []>} : vector<24x16xbf16>, vector<16x256xbf16>, vector<24x256xf32> -> vector<24x256xf32>
    %4 = vector.extract_strided_slice %3 {offsets = [0, 0], sizes = [24, 128], strides = [1, 1]} : vector<24x256xf32> to vector<24x128xf32>
    %c0_3 = arith.constant 0 : index
    %c0_4 = arith.constant 0 : index
    %5 = vector.load %arg4[%c0_3, %c0_4] : memref<10x128xf32, #tpu.memory_space<vmem>>, vector<1x128xf32>
    %6 = vector.broadcast %5 : vector<1x128xf32> to vector<24x128xf32>
    %7 = arith.addf %4, %6 : vector<24x128xf32>
    %cst_5 = arith.constant 0.000000e+00 : f32
    %8 = vector.broadcast %cst_5 : f32 to vector<24x128xf32>
    %9 = arith.maximumf %7, %8 : vector<24x128xf32>
    %10 = vector.extract_strided_slice %3 {offsets = [0, 128], sizes = [24, 128], strides = [1, 1]} : vector<24x256xf32> to vector<24x128xf32>
    %c1 = arith.constant 1 : index
    %c0_6 = arith.constant 0 : index
    %11 = vector.load %arg4[%c1, %c0_6] : memref<10x128xf32, #tpu.memory_space<vmem>>, vector<1x128xf32>
    %12 = vector.broadcast %11 : vector<1x128xf32> to vector<24x128xf32>
    %13 = arith.addf %10, %12 : vector<24x128xf32>
    %14 = arith.truncf %9 : vector<24x128xf32> to vector<24x128xbf16>
    %c0_7 = arith.constant 0 : index
    %c0_8 = arith.constant 0 : index
    %15 = vector.load %arg3[%c0_7, %c0_8] : memref<128x1024xbf16, #tpu.memory_space<vmem>>, vector<128x128xbf16>
    %cst_9 = arith.constant dense<0.000000e+00> : vector<24x128xf32>
    %16 = tpu.matmul %14, %15, %cst_9 {dimension_numbers = #tpu.dot_dimension_numbers<[1], [0], [0], [1], [0, 0, 1, 1], [], []>} : vector<24x128xbf16>, vector<128x128xbf16>, vector<24x128xf32> -> vector<24x128xf32>
    %c2 = arith.constant 2 : index
    %c0_10 = arith.constant 0 : index
    %17 = vector.load %arg4[%c2, %c0_10] : memref<10x128xf32, #tpu.memory_space<vmem>>, vector<1x128xf32>
    %18 = vector.broadcast %17 : vector<1x128xf32> to vector<24x128xf32>
    %19 = arith.addf %16, %18 : vector<24x128xf32>
    %20 = arith.addf %19, %13 : vector<24x128xf32>
    %cst_11 = arith.constant 0.000000e+00 : f32
    %21 = vector.broadcast %cst_11 : f32 to vector<24x128xf32>
    %22 = arith.maximumf %20, %21 : vector<24x128xf32>
    %23 = arith.truncf %22 : vector<24x128xf32> to vector<24x128xbf16>
    %c0_12 = arith.constant 0 : index
    %c128 = arith.constant 128 : index
    %24 = vector.load %arg3[%c0_12, %c128] : memref<128x1024xbf16, #tpu.memory_space<vmem>>, vector<128x128xbf16>
    %cst_13 = arith.constant dense<0.000000e+00> : vector<24x128xf32>
    %25 = tpu.matmul %23, %24, %cst_13 {dimension_numbers = #tpu.dot_dimension_numbers<[1], [0], [0], [1], [0, 0, 1, 1], [], []>} : vector<24x128xbf16>, vector<128x128xbf16>, vector<24x128xf32> -> vector<24x128xf32>
    %c3 = arith.constant 3 : index
    %c0_14 = arith.constant 0 : index
    %26 = vector.load %arg4[%c3, %c0_14] : memref<10x128xf32, #tpu.memory_space<vmem>>, vector<1x128xf32>
    %27 = vector.broadcast %26 : vector<1x128xf32> to vector<24x128xf32>
    %28 = arith.addf %25, %27 : vector<24x128xf32>
    %cst_15 = arith.constant 0.000000e+00 : f32
    %29 = vector.broadcast %cst_15 : f32 to vector<24x128xf32>
    %30 = arith.maximumf %28, %29 : vector<24x128xf32>
    %31 = arith.truncf %30 : vector<24x128xf32> to vector<24x128xbf16>
    %c0_16 = arith.constant 0 : index
    %c256 = arith.constant 256 : index
    %32 = vector.load %arg3[%c0_16, %c256] : memref<128x1024xbf16, #tpu.memory_space<vmem>>, vector<128x128xbf16>
    %cst_17 = arith.constant dense<0.000000e+00> : vector<24x128xf32>
    %33 = tpu.matmul %31, %32, %cst_17 {dimension_numbers = #tpu.dot_dimension_numbers<[1], [0], [0], [1], [0, 0, 1, 1], [], []>} : vector<24x128xbf16>, vector<128x128xbf16>, vector<24x128xf32> -> vector<24x128xf32>
    %c4 = arith.constant 4 : index
    %c0_18 = arith.constant 0 : index
    %34 = vector.load %arg4[%c4, %c0_18] : memref<10x128xf32, #tpu.memory_space<vmem>>, vector<1x128xf32>
    %35 = vector.broadcast %34 : vector<1x128xf32> to vector<24x128xf32>
    %36 = arith.addf %33, %35 : vector<24x128xf32>
    %37 = arith.addf %36, %22 : vector<24x128xf32>
    %cst_19 = arith.constant 0.000000e+00 : f32
    %38 = vector.broadcast %cst_19 : f32 to vector<24x128xf32>
    %39 = arith.maximumf %37, %38 : vector<24x128xf32>
    %40 = arith.truncf %39 : vector<24x128xf32> to vector<24x128xbf16>
    %c0_20 = arith.constant 0 : index
    %c384 = arith.constant 384 : index
    %41 = vector.load %arg3[%c0_20, %c384] : memref<128x1024xbf16, #tpu.memory_space<vmem>>, vector<128x128xbf16>
    %cst_21 = arith.constant dense<0.000000e+00> : vector<24x128xf32>
    %42 = tpu.matmul %40, %41, %cst_21 {dimension_numbers = #tpu.dot_dimension_numbers<[1], [0], [0], [1], [0, 0, 1, 1], [], []>} : vector<24x128xbf16>, vector<128x128xbf16>, vector<24x128xf32> -> vector<24x128xf32>
    %c5 = arith.constant 5 : index
    %c0_22 = arith.constant 0 : index
    %43 = vector.load %arg4[%c5, %c0_22] : memref<10x128xf32, #tpu.memory_space<vmem>>, vector<1x128xf32>
    %44 = vector.broadcast %43 : vector<1x128xf32> to vector<24x128xf32>
    %45 = arith.addf %42, %44 : vector<24x128xf32>
    %cst_23 = arith.constant 0.000000e+00 : f32
    %46 = vector.broadcast %cst_23 : f32 to vector<24x128xf32>
    %47 = arith.maximumf %45, %46 : vector<24x128xf32>
    %48 = arith.truncf %47 : vector<24x128xf32> to vector<24x128xbf16>
    %c0_24 = arith.constant 0 : index
    %c512 = arith.constant 512 : index
    %49 = vector.load %arg3[%c0_24, %c512] : memref<128x1024xbf16, #tpu.memory_space<vmem>>, vector<128x128xbf16>
    %cst_25 = arith.constant dense<0.000000e+00> : vector<24x128xf32>
    %50 = tpu.matmul %48, %49, %cst_25 {dimension_numbers = #tpu.dot_dimension_numbers<[1], [0], [0], [1], [0, 0, 1, 1], [], []>} : vector<24x128xbf16>, vector<128x128xbf16>, vector<24x128xf32> -> vector<24x128xf32>
    %c6 = arith.constant 6 : index
    %c0_26 = arith.constant 0 : index
    %51 = vector.load %arg4[%c6, %c0_26] : memref<10x128xf32, #tpu.memory_space<vmem>>, vector<1x128xf32>
    %52 = vector.broadcast %51 : vector<1x128xf32> to vector<24x128xf32>
    %53 = arith.addf %50, %52 : vector<24x128xf32>
    %54 = arith.addf %53, %39 : vector<24x128xf32>
    %cst_27 = arith.constant 0.000000e+00 : f32
    %55 = vector.broadcast %cst_27 : f32 to vector<24x128xf32>
    %56 = arith.maximumf %54, %55 : vector<24x128xf32>
    %57 = arith.truncf %56 : vector<24x128xf32> to vector<24x128xbf16>
    %c0_28 = arith.constant 0 : index
    %c640 = arith.constant 640 : index
    %58 = vector.load %arg3[%c0_28, %c640] : memref<128x1024xbf16, #tpu.memory_space<vmem>>, vector<128x128xbf16>
    %cst_29 = arith.constant dense<0.000000e+00> : vector<24x128xf32>
    %59 = tpu.matmul %57, %58, %cst_29 {dimension_numbers = #tpu.dot_dimension_numbers<[1], [0], [0], [1], [0, 0, 1, 1], [], []>} : vector<24x128xbf16>, vector<128x128xbf16>, vector<24x128xf32> -> vector<24x128xf32>
    %c7 = arith.constant 7 : index
    %c0_30 = arith.constant 0 : index
    %60 = vector.load %arg4[%c7, %c0_30] : memref<10x128xf32, #tpu.memory_space<vmem>>, vector<1x128xf32>
    %61 = vector.broadcast %60 : vector<1x128xf32> to vector<24x128xf32>
    %62 = arith.addf %59, %61 : vector<24x128xf32>
    %cst_31 = arith.constant 0.000000e+00 : f32
    %63 = vector.broadcast %cst_31 : f32 to vector<24x128xf32>
    %64 = arith.maximumf %62, %63 : vector<24x128xf32>
    %65 = arith.truncf %64 : vector<24x128xf32> to vector<24x128xbf16>
    %c0_32 = arith.constant 0 : index
    %c768 = arith.constant 768 : index
    %66 = vector.load %arg3[%c0_32, %c768] : memref<128x1024xbf16, #tpu.memory_space<vmem>>, vector<128x128xbf16>
    %cst_33 = arith.constant dense<0.000000e+00> : vector<24x128xf32>
    %67 = tpu.matmul %65, %66, %cst_33 {dimension_numbers = #tpu.dot_dimension_numbers<[1], [0], [0], [1], [0, 0, 1, 1], [], []>} : vector<24x128xbf16>, vector<128x128xbf16>, vector<24x128xf32> -> vector<24x128xf32>
    %c8 = arith.constant 8 : index
    %c0_34 = arith.constant 0 : index
    %68 = vector.load %arg4[%c8, %c0_34] : memref<10x128xf32, #tpu.memory_space<vmem>>, vector<1x128xf32>
    %69 = vector.broadcast %68 : vector<1x128xf32> to vector<24x128xf32>
    %70 = arith.addf %67, %69 : vector<24x128xf32>
    %71 = arith.addf %70, %56 : vector<24x128xf32>
    %cst_35 = arith.constant 0.000000e+00 : f32
    %72 = vector.broadcast %cst_35 : f32 to vector<24x128xf32>
    %73 = arith.maximumf %71, %72 : vector<24x128xf32>
    %74 = arith.truncf %73 : vector<24x128xf32> to vector<24x128xbf16>
    %c0_36 = arith.constant 0 : index
    %c896 = arith.constant 896 : index
    %75 = vector.load %arg3[%c0_36, %c896] : memref<128x1024xbf16, #tpu.memory_space<vmem>>, vector<128x128xbf16>
    %cst_37 = arith.constant dense<0.000000e+00> : vector<24x128xf32>
    %76 = tpu.matmul %74, %75, %cst_37 {dimension_numbers = #tpu.dot_dimension_numbers<[1], [0], [0], [1], [0, 0, 1, 1], [], []>} : vector<24x128xbf16>, vector<128x128xbf16>, vector<24x128xf32> -> vector<24x128xf32>
    %c9 = arith.constant 9 : index
    %c0_38 = arith.constant 0 : index
    %77 = vector.load %arg4[%c9, %c0_38] : memref<10x128xf32, #tpu.memory_space<vmem>>, vector<1x128xf32>
    %78 = vector.broadcast %77 : vector<1x128xf32> to vector<24x128xf32>
    %79 = arith.addf %76, %78 : vector<24x128xf32>
    %80 = math.absf %79 : vector<24x128xf32>
    %c0_39 = arith.constant 0 : index
    %c0_40 = arith.constant 0 : index
    %81 = vector.load %arg5[%c0_39, %c0_40] : memref<24x128xf32, #tpu.memory_space<vmem>>, vector<24x128xf32>
    tpu.vector_store %arg5[%c0_39, %c0_40], %80 {strides = array<i32>} : memref<24x128xf32, #tpu.memory_space<vmem>>, vector<24x128xf32>,
    return
  }
  func.func @transform_0(%arg0: i32) -> (i32, i32) {
    %c0_i32 = arith.constant 0 : i32
    %c0_i32_0 = arith.constant 0 : i32
    return %arg0, %c0_i32 : i32, i32
  }
  func.func @transform_1(%arg0: i32) -> (i32, i32) {
    %c0_i32 = arith.constant 0 : i32
    %c0_i32_0 = arith.constant 0 : i32
    %c0_i32_1 = arith.constant 0 : i32
    return %c0_i32, %c0_i32_0 : i32, i32
  }
  func.func @transform_2(%arg0: i32) -> (i32, i32) {
    %c0_i32 = arith.constant 0 : i32
    %c0_i32_0 = arith.constant 0 : i32
    %c0_i32_1 = arith.constant 0 : i32
    return %c0_i32, %c0_i32_0 : i32, i32
  }
  func.func @transform_3(%arg0: i32) -> (i32, i32) {
    %c0_i32 = arith.constant 0 : i32
    %c0_i32_0 = arith.constant 0 : i32
    %c0_i32_1 = arith.constant 0 : i32
    return %c0_i32, %c0_i32_0 : i32, i32
  }
  func.func @transform_4(%arg0: i32) -> (i32, i32) {
    %c0_i32 = arith.constant 0 : i32
    %c0_i32_0 = arith.constant 0 : i32
    return %arg0, %c0_i32 : i32, i32
  }
}

</mosaic_0001>

<llo_original>
// kernel: hook_phynet_forward.1
$region0: #{hook_phynet_forward.1}
  #allocation0 [shape = 'u32[]', space=smem, size = 0x4, offset = 0x4, fixed_abs, tag = 'smem constant byte address 0x4 - core index']
  #allocation1 [shape = 'u32[144,128]{1,0:T(1,128)}', space=vmem, size = 0x12000, scoped, tag = 'internal scratch']
  %s0 = inlined_call_operand.vmem [shape: f32[24,16], index: 0, kind: input, shape index: {}]
  %s1 = inlined_call_operand.vmem [shape: bf16[16,256], index: 1, kind: input, shape index: {}]
  %s2 = inlined_call_operand.hbm [shape: bf16[128,1024], index: 2, kind: input, shape index: {}]
  %s3 = inlined_call_operand.vmem [shape: f32[10,128], index: 3, kind: input, shape index: {}]
  %s4 = inlined_call_operand.vmem [shape: f32[24,128], index: 4, kind: output, shape index: {}]
  %s5 = sld [smem:[#allocation0]]
  $region30: #{hook_phynet_forward.1} parent=0
    _
  %s7 = ssub.s32 1, %s5
  %s8 = scalar_select 0, %s7, %s5
  $region1: #{hook_phynet_forward.1} parent=0
    #allocation2 [shape = 'u8[262144]{0}', space=vmem, size = 0x40000, scoped, tag = 'input window, operand 2, single buffered']
    #allocation3 [shape = 's32[1]{0}', space=sflag, size = 0x4, scoped, tag = 'scoped memory for hook_phynet_forward.1']
    %9 = vsyncpa [#allocation3], 0
    // Predicated region
    $region2: #{hook_phynet_forward.1} parent=1 // pred_check
      _
    $region3: #{hook_phynet_forward.1} parent=1 // pred_check_branch
      %11 = sbr.rel (0) target = $region5
    $region4: #{hook_phynet_forward.1} parent=1 // pred_region
      _
    $region5: #{hook_phynet_forward.1} parent=1 // pred_fallthru
      _
    // Predicated region
    $region6: #{hook_phynet_forward.1} parent=1 // pred_check
      _
    $region7: #{hook_phynet_forward.1} parent=1 // pred_check_branch
      %13 = sbr.rel (0) target = $region9
    $region8: #{hook_phynet_forward.1} parent=1 // pred_region
      _
    $region9: #{hook_phynet_forward.1} parent=1 // pred_fallthru
      _
    // Predicated region
    $region10: #{hook_phynet_forward.1} parent=1 // pred_check
      _
    $region11: #{hook_phynet_forward.1} parent=1 // pred_check_branch
      %15 = sbr.rel (0) target = $region13
    $region12: #{hook_phynet_forward.1} parent=1 // pred_region
      %s17 = ssub.s32 8192, 8192
      %18 = vsyncadd [#allocation3], %s17
      %s19 = sshll.u32 [#allocation2], 4
      %s20 = int_to_ptr.vmem [resolvable:$true] %s19
      %25 = dma.hbm_to_vmem [thread:$0]  %s2, 8192, %s20, [#allocation3], 512, 512, 32
    $region13: #{hook_phynet_forward.1} parent=1 // pred_fallthru
      _
    // Predicated region
    $region14: #{hook_phynet_forward.1} parent=1 // pred_check
      _
    $region15: #{hook_phynet_forward.1} parent=1 // pred_check_branch
      %27 = sbr.rel (0) target = $region17
    $region16: #{hook_phynet_forward.1} parent=1 // pred_region
      _
    $region17: #{hook_phynet_forward.1} parent=1 // pred_fallthru
      _
    // Predicated region
    $region18: #{hook_phynet_forward.1} parent=1 // pred_check
      _
    $region19: #{hook_phynet_forward.1} parent=1 // pred_check_branch
      %29 = sbr.rel (0) target = $region21
    $region20: #{hook_phynet_forward.1} parent=1 // pred_region
      %30 = dma.done [#allocation3], 8192
    $region21: #{hook_phynet_forward.1} parent=1 // pred_fallthru
      _
    %v32 = vld [vmem:[%s0] sm:$0xff]
    %v33 = vld [vmem:[%s0 + $0x8] sm:$0xff]
    %v34 = vld [vmem:[%s0 + $0x10] sm:$0xff]
    %v35 = vpack.c.bf16 %v33, %v32
    %v36 = vpack.c.bf16 %v34, %v34
    %v37 = vld [vmem:[%s1] sm:$0xff]
    %v38 = vld [vmem:[%s1 + $0x8] sm:$0xff]
    %v41 = vunpack.c.l.b16 %v37
    %v42 = vunpack.c.h.b16 %v37
    %v43 = vunpack.c.l.b16 %v38
    %v44 = vunpack.c.h.b16 %v38
    %v45 = vpack.c.b16 %v43, %v41
    %v46 = vpack.c.b16 %v44, %v42
    %vm49 = vcmask 130048
    %v51 = vsel %vm49, %v35, 0
    %v54 = vsel %vm49, %v36, 0
    %56 = vmatprep.subr.bf16.mxu0 0
    %57 = vmatpush1.bf16.msra.mxu0 0
    %58 = vmatprep.subr.bf16.mxu0 0
    %59 = vmatpush1.bf16.msra.mxu0 0
    %60 = vmatprep.subr.bf16.mxu0 0
    %61 = vmatpush1.bf16.msra.mxu0 0
    %62 = vmatprep.subr.bf16.mxu0 0
    %63 = vmatpush1.bf16.msra.mxu0 0
    %64 = vmatprep.subr.bf16.mxu0 0
    %65 = vmatpush1.bf16.msra.mxu0 0
    %66 = vmatprep.subr.bf16.mxu0 0
    %67 = vmatpush1.bf16.msra.mxu0 0
    %68 = vmatprep.subr.bf16.mxu0 0
    %69 = vmatpush1.bf16.msra.mxu0 0
    %70 = vmatprep.subr.bf16.mxu0 %v46
    %71 = vmatpush1.bf16.msra.mxu0 %v45
    %72 = vmatprep.subr.bf16.mxu0 0
    %73 = vmatpush2.bf16.msra.mxu0 0
    %74 = vmatprep.subr.bf16.mxu0 0
    %75 = vmatpush2.bf16.msra.mxu0 0
    %76 = vmatprep.subr.bf16.mxu0 0
    %77 = vmatpush2.bf16.msra.mxu0 0
    %78 = vmatprep.subr.bf16.mxu0 0
    %79 = vmatpush2.bf16.msra.mxu0 0
    %80 = vmatprep.subr.bf16.mxu0 0
    %81 = vmatpush2.bf16.msra.mxu0 0
    %82 = vmatprep.subr.bf16.mxu0 0
    %83 = vmatpush2.bf16.msra.mxu0 0
    %84 = vmatprep.subr.bf16.mxu0 0
    %85 = vmatpush2.bf16.msra.mxu0 0
    %86 = vmatprep.subr.bf16.mxu0 0
    %87 = vmatpush2.bf16.msra.mxu0 0
    %88 = vmatprep.mubr.bf16.mxu0 0
    %89 = vmatmul.mubr.bf16.gmra.mxu0 %v51
    %v90 = vpop.f32.mrf.mxu0
    %v91 = vadd.f32 0.0, %v90
    %v92 = vpop.f32.mrf.mxu0
    %v93 = vadd.f32 0.0, %v92
    %v94 = vpop.f32.mrf.mxu0
    %v95 = vadd.f32 0.0, %v94
    %v96 = vpop.f32.mrf.mxu0
    %v97 = vadd.f32 0.0, %v96
    %98 = vmatprep.mubr.bf16.mxu0 0
    %99 = vmatmul.mubr.bf16.gmra.mxu0 %v54
    %v100 = vpop.f32.mrf.mxu0
    %v101 = vadd.f32 0.0, %v100
    %v102 = vpop.f32.mrf.mxu0
    %v103 = vadd.f32 0.0, %v102
    %v104 = vpop.f32.mrf.mxu0
    %v105 = vpop.f32.mrf.mxu0
    %106 = vdwg.mxu0
    %v107 = vld [vmem:[%s3] sm:$0x1]
    %v108 = vlaneseq
    %v109 = vshrl.u32 %v108, 7
    %v110 = vsub.s32 0, %v109
    %v111 = vrot.slane %v107, %v110
    %v112 = vadd.f32 %v91, %v111
    %v113 = vadd.f32 %v95, %v111
    %v114 = vadd.f32 %v101, %v111
    %v115 = vmax.f32 %v112, 0.0
    %v116 = vmax.f32 %v113, 0.0
    %v117 = vmax.f32 %v114, 0.0
    %v118 = vld [vmem:[%s3 + $0x1] sm:$0x1]
    %v119 = vlaneseq
    %v120 = vshrl.u32 %v119, 7
    %v121 = vsub.s32 0, %v120
    %v122 = vrot.slane %v118, %v121
    %v123 = vadd.f32 %v93, %v122
    %v124 = vadd.f32 %v97, %v122
    %v125 = vadd.f32 %v103, %v122
    %v126 = vpack.c.bf16 %v116, %v115
    %v127 = vpack.c.bf16 %v117, %v117
    %v128 = vld [vmem:[#allocation2] sm:$0xf]
    %v129 = vld [vmem:[#allocation2 + $0x20] sm:$0xf]
    %v130 = vld [vmem:[#allocation2 + $0x40] sm:$0xf]
    %v131 = vld [vmem:[#allocation2 + $0x60] sm:$0xf]
    %v132 = vld [vmem:[#allocation2 + $0x80] sm:$0xf]
    %v133 = vld [vmem:[#allocation2 + $0xa0] sm:$0xf]
    %v134 = vld [vmem:[#allocation2 + $0xc0] sm:$0xf]
    %v135 = vld [vmem:[#allocation2 + $0xe0] sm:$0xf]
    %v136 = vld [vmem:[#allocation2 + $0x100] sm:$0xf]
    %v137 = vld [vmem:[#allocation2 + $0x120] sm:$0xf]
    %v138 = vld [vmem:[#allocation2 + $0x140] sm:$0xf]
    %v139 = vld [vmem:[#allocation2 + $0x160] sm:$0xf]
    %v140 = vld [vmem:[#allocation2 + $0x180] sm:$0xf]
    %v141 = vld [vmem:[#allocation2 + $0x1a0] sm:$0xf]
    %v142 = vld [vmem:[#allocation2 + $0x1c0] sm:$0xf]
    %v143 = vld [vmem:[#allocation2 + $0x1e0] sm:$0xf]
    %v144 = vld [vmem:[%s3 + $0x2] sm:$0x1]
    %v145 = vlaneseq
    %v146 = vshrl.u32 %v145, 7
    %v147 = vsub.s32 0, %v146
    %v148 = vrot.slane %v144, %v147
    %v165 = vunpack.c.l.b16 %v128
    %v166 = vunpack.c.l.b16 %v129
    %v167 = vunpack.c.l.b16 %v130
    %v168 = vunpack.c.l.b16 %v131
    %v169 = vunpack.c.l.b16 %v132
    %v170 = vunpack.c.l.b16 %v133
    %v171 = vunpack.c.l.b16 %v134
    %v172 = vunpack.c.l.b16 %v135
    %v173 = vunpack.c.l.b16 %v136
    %v174 = vunpack.c.l.b16 %v137
    %v175 = vunpack.c.l.b16 %v138
    %v176 = vunpack.c.l.b16 %v139
    %v177 = vunpack.c.l.b16 %v140
    %v178 = vunpack.c.l.b16 %v141
    %v179 = vunpack.c.l.b16 %v142
    %v180 = vunpack.c.l.b16 %v143
    %v181 = vpack.c.b16 %v166, %v165
    %v182 = vpack.c.b16 %v168, %v167
    %v183 = vpack.c.b16 %v170, %v169
    %v184 = vpack.c.b16 %v172, %v171
    %v185 = vpack.c.b16 %v174, %v173
    %v186 = vpack.c.b16 %v176, %v175
    %v187 = vpack.c.b16 %v178, %v177
    %v188 = vpack.c.b16 %v180, %v179
    %197 = vmatprep.subr.bf16.mxu0 0
    %198 = vmatpush1.bf16.msra.mxu0 %v188
    %199 = vmatprep.subr.bf16.mxu0 0
    %200 = vmatpush1.bf16.msra.mxu0 %v187
    %201 = vmatprep.subr.bf16.mxu0 0
    %202 = vmatpush1.bf16.msra.mxu0 %v186
    %203 = vmatprep.subr.bf16.mxu0 0
    %204 = vmatpush1.bf16.msra.mxu0 %v185
    %205 = vmatprep.subr.bf16.mxu0 0
    %206 = vmatpush1.bf16.msra.mxu0 %v184
    %207 = vmatprep.subr.bf16.mxu0 0
    %208 = vmatpush1.bf16.msra.mxu0 %v183
    %209 = vmatprep.subr.bf16.mxu0 0
    %210 = vmatpush1.bf16.msra.mxu0 %v182
    %211 = vmatprep.subr.bf16.mxu0 0
    %212 = vmatpush1.bf16.msra.mxu0 %v181
    %213 = vmatprep.subr.bf16.mxu0 0
    %214 = vmatpush2.bf16.msra.mxu0 0
    %215 = vmatprep.subr.bf16.mxu0 0
    %216 = vmatpush2.bf16.msra.mxu0 0
    %217 = vmatprep.subr.bf16.mxu0 0
    %218 = vmatpush2.bf16.msra.mxu0 0
    %219 = vmatprep.subr.bf16.mxu0 0
    %220 = vmatpush2.bf16.msra.mxu0 0
    %221 = vmatprep.subr.bf16.mxu0 0
    %222 = vmatpush2.bf16.msra.mxu0 0
    %223 = vmatprep.subr.bf16.mxu0 0
    %224 = vmatpush2.bf16.msra.mxu0 0
    %225 = vmatprep.subr.bf16.mxu0 0
    %226 = vmatpush2.bf16.msra.mxu0 0
    %227 = vmatprep.subr.bf16.mxu0 0
    %228 = vmatpush2.bf16.msra.mxu0 0
    %229 = vmatprep.mubr.bf16.mxu0 0
    %230 = vmatmul.mubr.bf16.gmra.mxu0 %v126
    %v231 = vpop.f32.mrf.mxu0
    %v232 = vadd.f32 %v148, %v231
    %v233 = vpop.f32.mrf.mxu0
    %v234 = vpop.f32.mrf.mxu0
    %v235 = vadd.f32 %v148, %v234
    %v236 = vpop.f32.mrf.mxu0
    %237 = vmatprep.mubr.bf16.mxu0 0
    %238 = vmatmul.mubr.bf16.gmra.mxu0 %v127
    %v239 = vpop.f32.mrf.mxu0
    %v240 = vadd.f32 %v148, %v239
    %v241 = vpop.f32.mrf.mxu0
    %v242 = vpop.f32.mrf.mxu0
    %v243 = vpop.f32.mrf.mxu0
    %244 = vdwg.mxu0
    %v245 = vadd.f32 %v232, %v123
    %v246 = vadd.f32 %v235, %v124
    %v247 = vadd.f32 %v240, %v125
    %v248 = vmax.f32 %v245, 0.0
    %v249 = vmax.f32 %v246, 0.0
    %v250 = vmax.f32 %v247, 0.0
    %v251 = vpack.c.bf16 %v249, %v248
    %v252 = vpack.c.bf16 %v250, %v250
    %v253 = vld [vmem:[#allocation2 + $0x4] sm:$0xf]
    %v254 = vld [vmem:[#allocation2 + $0x24] sm:$0xf]
    %v255 = vld [vmem:[#allocation2 + $0x44] sm:$0xf]
    %v256 = vld [vmem:[#allocation2 + $0x64] sm:$0xf]
    %v257 = vld [vmem:[#allocation2 + $0x84] sm:$0xf]
    %v258 = vld [vmem:[#allocation2 + $0xa4] sm:$0xf]
    %v259 = vld [vmem:[#allocation2 + $0xc4] sm:$0xf]
    %v260 = vld [vmem:[#allocation2 + $0xe4] sm:$0xf]
    %v261 = vld [vmem:[#allocation2 + $0x104] sm:$0xf]
    %v262 = vld [vmem:[#allocation2 + $0x124] sm:$0xf]
    %v263 = vld [vmem:[#allocation2 + $0x144] sm:$0xf]
    %v264 = vld [vmem:[#allocation2 + $0x164] sm:$0xf]
    %v265 = vld [vmem:[#allocation2 + $0x184] sm:$0xf]
    %v266 = vld [vmem:[#allocation2 + $0x1a4] sm:$0xf]
    %v267 = vld [vmem:[#allocation2 + $0x1c4] sm:$0xf]
    %v268 = vld [vmem:[#allocation2 + $0x1e4] sm:$0xf]
    %v269 = vld [vmem:[%s3 + $0x3] sm:$0x1]
    %v270 = vlaneseq
    %v271 = vshrl.u32 %v270, 7
    %v272 = vsub.s32 0, %v271
    %v273 = vrot.slane %v269, %v272
    %v290 = vunpack.c.l.b16 %v253
    %v291 = vunpack.c.l.b16 %v254
    %v292 = vunpack.c.l.b16 %v255
    %v293 = vunpack.c.l.b16 %v256
    %v294 = vunpack.c.l.b16 %v257
    %v295 = vunpack.c.l.b16 %v258
    %v296 = vunpack.c.l.b16 %v259
    %v297 = vunpack.c.l.b16 %v260
    %v298 = vunpack.c.l.b16 %v261
    %v299 = vunpack.c.l.b16 %v262
    %v300 = vunpack.c.l.b16 %v263
    %v301 = vunpack.c.l.b16 %v264
    %v302 = vunpack.c.l.b16 %v265
    %v303 = vunpack.c.l.b16 %v266
    %v304 = vunpack.c.l.b16 %v267
    %v305 = vunpack.c.l.b16 %v268
    %v306 = vpack.c.b16 %v291, %v290
    %v307 = vpack.c.b16 %v293, %v292
    %v308 = vpack.c.b16 %v295, %v294
    %v309 = vpack.c.b16 %v297, %v296
    %v310 = vpack.c.b16 %v299, %v298
    %v311 = vpack.c.b16 %v301, %v300
    %v312 = vpack.c.b16 %v303, %v302
    %v313 = vpack.c.b16 %v305, %v304
    %322 = vmatprep.subr.bf16.mxu0 0
    %323 = vmatpush1.bf16.msra.mxu0 %v313
    %324 = vmatprep.subr.bf16.mxu0 0
    %325 = vmatpush1.bf16.msra.mxu0 %v312
    %326 = vmatprep.subr.bf16.mxu0 0
    %327 = vmatpush1.bf16.msra.mxu0 %v311
    %328 = vmatprep.subr.bf16.mxu0 0
    %329 = vmatpush1.bf16.msra.mxu0 %v310
    %330 = vmatprep.subr.bf16.mxu0 0
    %331 = vmatpush1.bf16.msra.mxu0 %v309
    %332 = vmatprep.subr.bf16.mxu0 0
    %333 = vmatpush1.bf16.msra.mxu0 %v308
    %334 = vmatprep.subr.bf16.mxu0 0
    %335 = vmatpush1.bf16.msra.mxu0 %v307
    %336 = vmatprep.subr.bf16.mxu0 0
    %337 = vmatpush1.bf16.msra.mxu0 %v306
    %338 = vmatprep.subr.bf16.mxu0 0
    %339 = vmatpush2.bf16.msra.mxu0 0
    %340 = vmatprep.subr.bf16.mxu0 0
    %341 = vmatpush2.bf16.msra.mxu0 0
    %342 = vmatprep.subr.bf16.mxu0 0
    %343 = vmatpush2.bf16.msra.mxu0 0
    %344 = vmatprep.subr.bf16.mxu0 0
    %345 = vmatpush2.bf16.msra.mxu0 0
    %346 = vmatprep.subr.bf16.mxu0 0
    %347 = vmatpush2.bf16.msra.mxu0 0
    %348 = vmatprep.subr.bf16.mxu0 0
    %349 = vmatpush2.bf16.msra.mxu0 0
    %350 = vmatprep.subr.bf16.mxu0 0
    %351 = vmatpush2.bf16.msra.mxu0 0
    %352 = vmatprep.subr.bf16.mxu0 0
    %353 = vmatpush2.bf16.msra.mxu0 0
    %354 = vmatprep.mubr.bf16.mxu0 0
    %355 = vmatmul.mubr.bf16.gmra.mxu0 %v251
    %v356 = vpop.f32.mrf.mxu0
    %v357 = vadd.f32 %v273, %v356
    %v358 = vpop.f32.mrf.mxu0
    %v359 = vpop.f32.mrf.mxu0
    %v360 = vadd.f32 %v273, %v359
    %v361 = vpop.f32.mrf.mxu0
    %362 = vmatprep.mubr.bf16.mxu0 0
    %363 = vmatmul.mubr.bf16.gmra.mxu0 %v252
    %v364 = vpop.f32.mrf.mxu0
    %v365 = vadd.f32 %v273, %v364
    %v366 = vpop.f32.mrf.mxu0
    %v367 = vpop.f32.mrf.mxu0
    %v368 = vpop.f32.mrf.mxu0
    %369 = vdwg.mxu0
    %v370 = vmax.f32 %v357, 0.0
    %v371 = vmax.f32 %v360, 0.0
    %v372 = vmax.f32 %v365, 0.0
    %v373 = vpack.c.bf16 %v371, %v370
    %v374 = vpack.c.bf16 %v372, %v372
    %v375 = vld [vmem:[#allocation2 + $0x8] sm:$0xf]
    %v376 = vld [vmem:[#allocation2 + $0x28] sm:$0xf]
    %v377 = vld [vmem:[#allocation2 + $0x48] sm:$0xf]
    %v378 = vld [vmem:[#allocation2 + $0x68] sm:$0xf]
    %v379 = vld [vmem:[#allocation2 + $0x88] sm:$0xf]
    %v380 = vld [vmem:[#allocation2 + $0xa8] sm:$0xf]
    %v381 = vld [vmem:[#allocation2 + $0xc8] sm:$0xf]
    %v382 = vld [vmem:[#allocation2 + $0xe8] sm:$0xf]
    %v383 = vld [vmem:[#allocation2 + $0x108] sm:$0xf]
    %v384 = vld [vmem:[#allocation2 + $0x128] sm:$0xf]
    %v385 = vld [vmem:[#allocation2 + $0x148] sm:$0xf]
    %v386 = vld [vmem:[#allocation2 + $0x168] sm:$0xf]
    %v387 = vld [vmem:[#allocation2 + $0x188] sm:$0xf]
    %v388 = vld [vmem:[#allocation2 + $0x1a8] sm:$0xf]
    %v389 = vld [vmem:[#allocation2 + $0x1c8] sm:$0xf]
    %v390 = vld [vmem:[#allocation2 + $0x1e8] sm:$0xf]
    %v391 = vld [vmem:[%s3 + $0x4] sm:$0x1]
    %v392 = vlaneseq
    %v393 = vshrl.u32 %v392, 7
    %v394 = vsub.s32 0, %v393
    %v395 = vrot.slane %v391, %v394
    %v412 = vunpack.c.l.b16 %v375
    %v413 = vunpack.c.l.b16 %v376
    %v414 = vunpack.c.l.b16 %v377
    %v415 = vunpack.c.l.b16 %v378
    %v416 = vunpack.c.l.b16 %v379
    %v417 = vunpack.c.l.b16 %v380
    %v418 = vunpack.c.l.b16 %v381
    %v419 = vunpack.c.l.b16 %v382
    %v420 = vunpack.c.l.b16 %v383
    %v421 = vunpack.c.l.b16 %v384
    %v422 = vunpack.c.l.b16 %v385
    %v423 = vunpack.c.l.b16 %v386
    %v424 = vunpack.c.l.b16 %v387
    %v425 = vunpack.c.l.b16 %v388
    %v426 = vunpack.c.l.b16 %v389
    %v427 = vunpack.c.l.b16 %v390
    %v428 = vpack.c.b16 %v413, %v412
    %v429 = vpack.c.b16 %v415, %v414
    %v430 = vpack.c.b16 %v417, %v416
    %v431 = vpack.c.b16 %v419, %v418
    %v432 = vpack.c.b16 %v421, %v420
    %v433 = vpack.c.b16 %v423, %v422
    %v434 = vpack.c.b16 %v425, %v424
    %v435 = vpack.c.b16 %v427, %v426
    %444 = vmatprep.subr.bf16.mxu0 0
    %445 = vmatpush1.bf16.msra.mxu0 %v435
    %446 = vmatprep.subr.bf16.mxu0 0
    %447 = vmatpush1.bf16.msra.mxu0 %v434
    %448 = vmatprep.subr.bf16.mxu0 0
    %449 = vmatpush1.bf16.msra.mxu0 %v433
    %450 = vmatprep.subr.bf16.mxu0 0
    %451 = vmatpush1.bf16.msra.mxu0 %v432
    %452 = vmatprep.subr.bf16.mxu0 0
    %453 = vmatpush1.bf16.msra.mxu0 %v431
    %454 = vmatprep.subr.bf16.mxu0 0
    %455 = vmatpush1.bf16.msra.mxu0 %v430
    %456 = vmatprep.subr.bf16.mxu0 0
    %457 = vmatpush1.bf16.msra.mxu0 %v429
    %458 = vmatprep.subr.bf16.mxu0 0
    %459 = vmatpush1.bf16.msra.mxu0 %v428
    %460 = vmatprep.subr.bf16.mxu0 0
    %461 = vmatpush2.bf16.msra.mxu0 0
    %462 = vmatprep.subr.bf16.mxu0 0
    %463 = vmatpush2.bf16.msra.mxu0 0
    %464 = vmatprep.subr.bf16.mxu0 0
    %465 = vmatpush2.bf16.msra.mxu0 0
    %466 = vmatprep.subr.bf16.mxu0 0
    %467 = vmatpush2.bf16.msra.mxu0 0
    %468 = vmatprep.subr.bf16.mxu0 0
    %469 = vmatpush2.bf16.msra.mxu0 0
    %470 = vmatprep.subr.bf16.mxu0 0
    %471 = vmatpush2.bf16.msra.mxu0 0
    %472 = vmatprep.subr.bf16.mxu0 0
    %473 = vmatpush2.bf16.msra.mxu0 0
    %474 = vmatprep.subr.bf16.mxu0 0
    %475 = vmatpush2.bf16.msra.mxu0 0
    %476 = vmatprep.mubr.bf16.mxu0 0
    %477 = vmatmul.mubr.bf16.gmra.mxu0 %v373
    %v478 = vpop.f32.mrf.mxu0
    %v479 = vadd.f32 %v395, %v478
    %v480 = vpop.f32.mrf.mxu0
    %v481 = vpop.f32.mrf.mxu0
    %v482 = vadd.f32 %v395, %v481
    %v483 = vpop.f32.mrf.mxu0
    %484 = vmatprep.mubr.bf16.mxu0 0
    %485 = vmatmul.mubr.bf16.gmra.mxu0 %v374
    %v486 = vpop.f32.mrf.mxu0
    %v487 = vadd.f32 %v395, %v486
    %v488 = vpop.f32.mrf.mxu0
    %v489 = vpop.f32.mrf.mxu0
    %v490 = vpop.f32.mrf.mxu0
    %491 = vdwg.mxu0
    %v492 = vadd.f32 %v479, %v248
    %v493 = vadd.f32 %v482, %v249
    %v494 = vadd.f32 %v487, %v250
    %v495 = vmax.f32 %v492, 0.0
    %v496 = vmax.f32 %v493, 0.0
    %v497 = vmax.f32 %v494, 0.0
    %v498 = vpack.c.bf16 %v496, %v495
    %v499 = vpack.c.bf16 %v497, %v497
    %v500 = vld [vmem:[#allocation2 + $0xc] sm:$0xf]
    %v501 = vld [vmem:[#allocation2 + $0x2c] sm:$0xf]
    %v502 = vld [vmem:[#allocation2 + $0x4c] sm:$0xf]
    %v503 = vld [vmem:[#allocation2 + $0x6c] sm:$0xf]
    %v504 = vld [vmem:[#allocation2 + $0x8c] sm:$0xf]
    %v505 = vld [vmem:[#allocation2 + $0xac] sm:$0xf]
    %v506 = vld [vmem:[#allocation2 + $0xcc] sm:$0xf]
    %v507 = vld [vmem:[#allocation2 + $0xec] sm:$0xf]
    %v508 = vld [vmem:[#allocation2 + $0x10c] sm:$0xf]
    %v509 = vld [vmem:[#allocation2 + $0x12c] sm:$0xf]
    %v510 = vld [vmem:[#allocation2 + $0x14c] sm:$0xf]
    %v511 = vld [vmem:[#allocation2 + $0x16c] sm:$0xf]
    %v512 = vld [vmem:[#allocation2 + $0x18c] sm:$0xf]
    %v513 = vld [vmem:[#allocation2 + $0x1ac] sm:$0xf]
    %v514 = vld [vmem:[#allocation2 + $0x1cc] sm:$0xf]
    %v515 = vld [vmem:[#allocation2 + $0x1ec] sm:$0xf]
    %v516 = vld [vmem:[%s3 + $0x5] sm:$0x1]
    %v517 = vlaneseq
    %v518 = vshrl.u32 %v517, 7
    %v519 = vsub.s32 0, %v518
    %v520 = vrot.slane %v516, %v519
    %v537 = vunpack.c.l.b16 %v500
    %v538 = vunpack.c.l.b16 %v501
    %v539 = vunpack.c.l.b16 %v502
    %v540 = vunpack.c.l.b16 %v503
    %v541 = vunpack.c.l.b16 %v504
    %v542 = vunpack.c.l.b16 %v505
    %v543 = vunpack.c.l.b16 %v506
    %v544 = vunpack.c.l.b16 %v507
    %v545 = vunpack.c.l.b16 %v508
    %v546 = vunpack.c.l.b16 %v509
    %v547 = vunpack.c.l.b16 %v510
    %v548 = vunpack.c.l.b16 %v511
    %v549 = vunpack.c.l.b16 %v512
    %v550 = vunpack.c.l.b16 %v513
    %v551 = vunpack.c.l.b16 %v514
    %v552 = vunpack.c.l.b16 %v515
    %v553 = vpack.c.b16 %v538, %v537
    %v554 = vpack.c.b16 %v540, %v539
    %v555 = vpack.c.b16 %v542, %v541
    %v556 = vpack.c.b16 %v544, %v543
    %v557 = vpack.c.b16 %v546, %v545
    %v558 = vpack.c.b16 %v548, %v547
    %v559 = vpack.c.b16 %v550, %v549
    %v560 = vpack.c.b16 %v552, %v551
    %569 = vmatprep.subr.bf16.mxu0 0
    %570 = vmatpush1.bf16.msra.mxu0 %v560
    %571 = vmatprep.subr.bf16.mxu0 0
    %572 = vmatpush1.bf16.msra.mxu0 %v559
    %573 = vmatprep.subr.bf16.mxu0 0
    %574 = vmatpush1.bf16.msra.mxu0 %v558
    %575 = vmatprep.subr.bf16.mxu0 0
    %576 = vmatpush1.bf16.msra.mxu0 %v557
    %577 = vmatprep.subr.bf16.mxu0 0
    %578 = vmatpush1.bf16.msra.mxu0 %v556
    %579 = vmatprep.subr.bf16.mxu0 0
    %580 = vmatpush1.bf16.msra.mxu0 %v555
    %581 = vmatprep.subr.bf16.mxu0 0
    %582 = vmatpush1.bf16.msra.mxu0 %v554
    %583 = vmatprep.subr.bf16.mxu0 0
    %584 = vmatpush1.bf16.msra.mxu0 %v553
    %585 = vmatprep.subr.bf16.mxu0 0
    %586 = vmatpush2.bf16.msra.mxu0 0
    %587 = vmatprep.subr.bf16.mxu0 0
    %588 = vmatpush2.bf16.msra.mxu0 0
    %589 = vmatprep.subr.bf16.mxu0 0
    %590 = vmatpush2.bf16.msra.mxu0 0
    %591 = vmatprep.subr.bf16.mxu0 0
    %592 = vmatpush2.bf16.msra.mxu0 0
    %593 = vmatprep.subr.bf16.mxu0 0
    %594 = vmatpush2.bf16.msra.mxu0 0
    %595 = vmatprep.subr.bf16.mxu0 0
    %596 = vmatpush2.bf16.msra.mxu0 0
    %597 = vmatprep.subr.bf16.mxu0 0
    %598 = vmatpush2.bf16.msra.mxu0 0
    %599 = vmatprep.subr.bf16.mxu0 0
    %600 = vmatpush2.bf16.msra.mxu0 0
    %601 = vmatprep.mubr.bf16.mxu0 0
    %602 = vmatmul.mubr.bf16.gmra.mxu0 %v498
    %v603 = vpop.f32.mrf.mxu0
    %v604 = vadd.f32 %v520, %v603
    %v605 = vpop.f32.mrf.mxu0
    %v606 = vpop.f32.mrf.mxu0
    %v607 = vadd.f32 %v520, %v606
    %v608 = vpop.f32.mrf.mxu0
    %609 = vmatprep.mubr.bf16.mxu0 0
    %610 = vmatmul.mubr.bf16.gmra.mxu0 %v499
    %v611 = vpop.f32.mrf.mxu0
    %v612 = vadd.f32 %v520, %v611
    %v613 = vpop.f32.mrf.mxu0
    %v614 = vpop.f32.mrf.mxu0
    %v615 = vpop.f32.mrf.mxu0
    %616 = vdwg.mxu0
    %v617 = vmax.f32 %v604, 0.0
    %v618 = vmax.f32 %v607, 0.0
    %v619 = vmax.f32 %v612, 0.0
    %v620 = vpack.c.bf16 %v618, %v617
    %v621 = vpack.c.bf16 %v619, %v619
    %v622 = vld [vmem:[#allocation2 + $0x10] sm:$0xf]
    %v623 = vld [vmem:[#allocation2 + $0x30] sm:$0xf]
    %v624 = vld [vmem:[#allocation2 + $0x50] sm:$0xf]
    %v625 = vld [vmem:[#allocation2 + $0x70] sm:$0xf]
    %v626 = vld [vmem:[#allocation2 + $0x90] sm:$0xf]
    %v627 = vld [vmem:[#allocation2 + $0xb0] sm:$0xf]
    %v628 = vld [vmem:[#allocation2 + $0xd0] sm:$0xf]
    %v629 = vld [vmem:[#allocation2 + $0xf0] sm:$0xf]
    %v630 = vld [vmem:[#allocation2 + $0x110] sm:$0xf]
    %v631 = vld [vmem:[#allocation2 + $0x130] sm:$0xf]
    %v632 = vld [vmem:[#allocation2 + $0x150] sm:$0xf]
    %v633 = vld [vmem:[#allocation2 + $0x170] sm:$0xf]
    %v634 = vld [vmem:[#allocation2 + $0x190] sm:$0xf]
    %v635 = vld [vmem:[#allocation2 + $0x1b0] sm:$0xf]
    %v636 = vld [vmem:[#allocation2 + $0x1d0] sm:$0xf]
    %v637 = vld [vmem:[#allocation2 + $0x1f0] sm:$0xf]
    %v638 = vld [vmem:[%s3 + $0x6] sm:$0x1]
    %v639 = vlaneseq
    %v640 = vshrl.u32 %v639, 7
    %v641 = vsub.s32 0, %v640
    %v642 = vrot.slane %v638, %v641
    %v659 = vunpack.c.l.b16 %v622
    %v660 = vunpack.c.l.b16 %v623
    %v661 = vunpack.c.l.b16 %v624
    %v662 = vunpack.c.l.b16 %v625
    %v663 = vunpack.c.l.b16 %v626
    %v664 = vunpack.c.l.b16 %v627
    %v665 = vunpack.c.l.b16 %v628
    %v666 = vunpack.c.l.b16 %v629
    %v667 = vunpack.c.l.b16 %v630
    %v668 = vunpack.c.l.b16 %v631
    %v669 = vunpack.c.l.b16 %v632
    %v670 = vunpack.c.l.b16 %v633
    %v671 = vunpack.c.l.b16 %v634
    %v672 = vunpack.c.l.b16 %v635
    %v673 = vunpack.c.l.b16 %v636
    %v674 = vunpack.c.l.b16 %v637
    %v675 = vpack.c.b16 %v660, %v659
    %v676 = vpack.c.b16 %v662, %v661
    %v677 = vpack.c.b16 %v664, %v663
    %v678 = vpack.c.b16 %v666, %v665
    %v679 = vpack.c.b16 %v668, %v667
    %v680 = vpack.c.b16 %v670, %v669
    %v681 = vpack.c.b16 %v672, %v671
    %v682 = vpack.c.b16 %v674, %v673
    %691 = vmatprep.subr.bf16.mxu0 0
    %692 = vmatpush1.bf16.msra.mxu0 %v682
    %693 = vmatprep.subr.bf16.mxu0 0
    %694 = vmatpush1.bf16.msra.mxu0 %v681
    %695 = vmatprep.subr.bf16.mxu0 0
    %696 = vmatpush1.bf16.msra.mxu0 %v680
    %697 = vmatprep.subr.bf16.mxu0 0
    %698 = vmatpush1.bf16.msra.mxu0 %v679
    %699 = vmatprep.subr.bf16.mxu0 0
    %700 = vmatpush1.bf16.msra.mxu0 %v678
    %701 = vmatprep.subr.bf16.mxu0 0
    %702 = vmatpush1.bf16.msra.mxu0 %v677
    %703 = vmatprep.subr.bf16.mxu0 0
    %704 = vmatpush1.bf16.msra.mxu0 %v676
    %705 = vmatprep.subr.bf16.mxu0 0
    %706 = vmatpush1.bf16.msra.mxu0 %v675
    %707 = vmatprep.subr.bf16.mxu0 0
    %708 = vmatpush2.bf16.msra.mxu0 0
    %709 = vmatprep.subr.bf16.mxu0 0
    %710 = vmatpush2.bf16.msra.mxu0 0
    %711 = vmatprep.subr.bf16.mxu0 0
    %712 = vmatpush2.bf16.msra.mxu0 0
    %713 = vmatprep.subr.bf16.mxu0 0
    %714 = vmatpush2.bf16.msra.mxu0 0
    %715 = vmatprep.subr.bf16.mxu0 0
    %716 = vmatpush2.bf16.msra.mxu0 0
    %717 = vmatprep.subr.bf16.mxu0 0
    %718 = vmatpush2.bf16.msra.mxu0 0
    %719 = vmatprep.subr.bf16.mxu0 0
    %720 = vmatpush2.bf16.msra.mxu0 0
    %721 = vmatprep.subr.bf16.mxu0 0
    %722 = vmatpush2.bf16.msra.mxu0 0
    %723 = vmatprep.mubr.bf16.mxu0 0
    %724 = vmatmul.mubr.bf16.gmra.mxu0 %v620
    %v725 = vpop.f32.mrf.mxu0
    %v726 = vadd.f32 %v642, %v725
    %v727 = vpop.f32.mrf.mxu0
    %v728 = vpop.f32.mrf.mxu0
    %v729 = vadd.f32 %v642, %v728
    %v730 = vpop.f32.mrf.mxu0
    %731 = vmatprep.mubr.bf16.mxu0 0
    %732 = vmatmul.mubr.bf16.gmra.mxu0 %v621
    %v733 = vpop.f32.mrf.mxu0
    %v734 = vadd.f32 %v642, %v733
    %v735 = vpop.f32.mrf.mxu0
    %v736 = vpop.f32.mrf.mxu0
    %v737 = vpop.f32.mrf.mxu0
    %738 = vdwg.mxu0
    %v739 = vadd.f32 %v726, %v495
    %v740 = vadd.f32 %v729, %v496
    %v741 = vadd.f32 %v734, %v497
    %v742 = vmax.f32 %v739, 0.0
    %v743 = vmax.f32 %v740, 0.0
    %v744 = vmax.f32 %v741, 0.0
    %v745 = vpack.c.bf16 %v743, %v742
    %v746 = vpack.c.bf16 %v744, %v744
    %v747 = vld [vmem:[#allocation2 + $0x14] sm:$0xf]
    %v748 = vld [vmem:[#allocation2 + $0x34] sm:$0xf]
    %v749 = vld [vmem:[#allocation2 + $0x54] sm:$0xf]
    %v750 = vld [vmem:[#allocation2 + $0x74] sm:$0xf]
    %v751 = vld [vmem:[#allocation2 + $0x94] sm:$0xf]
    %v752 = vld [vmem:[#allocation2 + $0xb4] sm:$0xf]
    %v753 = vld [vmem:[#allocation2 + $0xd4] sm:$0xf]
    %v754 = vld [vmem:[#allocation2 + $0xf4] sm:$0xf]
    %v755 = vld [vmem:[#allocation2 + $0x114] sm:$0xf]
    %v756 = vld [vmem:[#allocation2 + $0x134] sm:$0xf]
    %v757 = vld [vmem:[#allocation2 + $0x154] sm:$0xf]
    %v758 = vld [vmem:[#allocation2 + $0x174] sm:$0xf]
    %v759 = vld [vmem:[#allocation2 + $0x194] sm:$0xf]
    %v760 = vld [vmem:[#allocation2 + $0x1b4] sm:$0xf]
    %v761 = vld [vmem:[#allocation2 + $0x1d4] sm:$0xf]
    %v762 = vld [vmem:[#allocation2 + $0x1f4] sm:$0xf]
    %v763 = vld [vmem:[%s3 + $0x7] sm:$0x1]
    %v764 = vlaneseq
    %v765 = vshrl.u32 %v764, 7
    %v766 = vsub.s32 0, %v765
    %v767 = vrot.slane %v763, %v766
    %v784 = vunpack.c.l.b16 %v747
    %v785 = vunpack.c.l.b16 %v748
    %v786 = vunpack.c.l.b16 %v749
    %v787 = vunpack.c.l.b16 %v750
    %v788 = vunpack.c.l.b16 %v751
    %v789 = vunpack.c.l.b16 %v752
    %v790 = vunpack.c.l.b16 %v753
    %v791 = vunpack.c.l.b16 %v754
    %v792 = vunpack.c.l.b16 %v755
    %v793 = vunpack.c.l.b16 %v756
    %v794 = vunpack.c.l.b16 %v757
    %v795 = vunpack.c.l.b16 %v758
    %v796 = vunpack.c.l.b16 %v759
    %v797 = vunpack.c.l.b16 %v760
    %v798 = vunpack.c.l.b16 %v761
    %v799 = vunpack.c.l.b16 %v762
    %v800 = vpack.c.b16 %v785, %v784
    %v801 = vpack.c.b16 %v787, %v786
    %v802 = vpack.c.b16 %v789, %v788
    %v803 = vpack.c.b16 %v791, %v790
    %v804 = vpack.c.b16 %v793, %v792
    %v805 = vpack.c.b16 %v795, %v794
    %v806 = vpack.c.b16 %v797, %v796
    %v807 = vpack.c.b16 %v799, %v798
    %816 = vmatprep.subr.bf16.mxu0 0
    %817 = vmatpush1.bf16.msra.mxu0 %v807
    %818 = vmatprep.subr.bf16.mxu0 0
    %819 = vmatpush1.bf16.msra.mxu0 %v806
    %820 = vmatprep.subr.bf16.mxu0 0
    %821 = vmatpush1.bf16.msra.mxu0 %v805
    %822 = vmatprep.subr.bf16.mxu0 0
    %823 = vmatpush1.bf16.msra.mxu0 %v804
    %824 = vmatprep.subr.bf16.mxu0 0
    %825 = vmatpush1.bf16.msra.mxu0 %v803
    %826 = vmatprep.subr.bf16.mxu0 0
    %827 = vmatpush1.bf16.msra.mxu0 %v802
    %828 = vmatprep.subr.bf16.mxu0 0
    %829 = vmatpush1.bf16.msra.mxu0 %v801
    %830 = vmatprep.subr.bf16.mxu0 0
    %831 = vmatpush1.bf16.msra.mxu0 %v800
    %832 = vmatprep.subr.bf16.mxu0 0
    %833 = vmatpush2.bf16.msra.mxu0 0
    %834 = vmatprep.subr.bf16.mxu0 0
    %835 = vmatpush2.bf16.msra.mxu0 0
    %836 = vmatprep.subr.bf16.mxu0 0
    %837 = vmatpush2.bf16.msra.mxu0 0
    %838 = vmatprep.subr.bf16.mxu0 0
    %839 = vmatpush2.bf16.msra.mxu0 0
    %840 = vmatprep.subr.bf16.mxu0 0
    %841 = vmatpush2.bf16.msra.mxu0 0
    %842 = vmatprep.subr.bf16.mxu0 0
    %843 = vmatpush2.bf16.msra.mxu0 0
    %844 = vmatprep.subr.bf16.mxu0 0
    %845 = vmatpush2.bf16.msra.mxu0 0
    %846 = vmatprep.subr.bf16.mxu0 0
    %847 = vmatpush2.bf16.msra.mxu0 0
    %848 = vmatprep.mubr.bf16.mxu0 0
    %849 = vmatmul.mubr.bf16.gmra.mxu0 %v745
    %v850 = vpop.f32.mrf.mxu0
    %v851 = vadd.f32 %v767, %v850
    %v852 = vpop.f32.mrf.mxu0
    %v853 = vpop.f32.mrf.mxu0
    %v854 = vadd.f32 %v767, %v853
    %v855 = vpop.f32.mrf.mxu0
    %856 = vmatprep.mubr.bf16.mxu0 0
    %857 = vmatmul.mubr.bf16.gmra.mxu0 %v746
    %v858 = vpop.f32.mrf.mxu0
    %v859 = vadd.f32 %v767, %v858
    %v860 = vpop.f32.mrf.mxu0
    %v861 = vpop.f32.mrf.mxu0
    %v862 = vpop.f32.mrf.mxu0
    %863 = vdwg.mxu0
    %v864 = vmax.f32 %v851, 0.0
    %v865 = vmax.f32 %v854, 0.0
    %v866 = vmax.f32 %v859, 0.0
    %v867 = vpack.c.bf16 %v865, %v864
    %v868 = vpack.c.bf16 %v866, %v866
    %v869 = vld [vmem:[#allocation2 + $0x18] sm:$0xf]
    %v870 = vld [vmem:[#allocation2 + $0x38] sm:$0xf]
    %v871 = vld [vmem:[#allocation2 + $0x58] sm:$0xf]
    %v872 = vld [vmem:[#allocation2 + $0x78] sm:$0xf]
    %v873 = vld [vmem:[#allocation2 + $0x98] sm:$0xf]
    %v874 = vld [vmem:[#allocation2 + $0xb8] sm:$0xf]
    %v875 = vld [vmem:[#allocation2 + $0xd8] sm:$0xf]
    %v876 = vld [vmem:[#allocation2 + $0xf8] sm:$0xf]
    %v877 = vld [vmem:[#allocation2 + $0x118] sm:$0xf]
    %v878 = vld [vmem:[#allocation2 + $0x138] sm:$0xf]
    %v879 = vld [vmem:[#allocation2 + $0x158] sm:$0xf]
    %v880 = vld [vmem:[#allocation2 + $0x178] sm:$0xf]
    %v881 = vld [vmem:[#allocation2 + $0x198] sm:$0xf]
    %v882 = vld [vmem:[#allocation2 + $0x1b8] sm:$0xf]
    %v883 = vld [vmem:[#allocation2 + $0x1d8] sm:$0xf]
    %v884 = vld [vmem:[#allocation2 + $0x1f8] sm:$0xf]
    %v885 = vld [vmem:[%s3 + $0x8] sm:$0x1]
    %v886 = vlaneseq
    %v887 = vshrl.u32 %v886, 7
    %v888 = vsub.s32 0, %v887
    %v889 = vrot.slane %v885, %v888
    %v906 = vunpack.c.l.b16 %v869
    %v907 = vunpack.c.l.b16 %v870
    %v908 = vunpack.c.l.b16 %v871
    %v909 = vunpack.c.l.b16 %v872
    %v910 = vunpack.c.l.b16 %v873
    %v911 = vunpack.c.l.b16 %v874
    %v912 = vunpack.c.l.b16 %v875
    %v913 = vunpack.c.l.b16 %v876
    %v914 = vunpack.c.l.b16 %v877
    %v915 = vunpack.c.l.b16 %v878
    %v916 = vunpack.c.l.b16 %v879
    %v917 = vunpack.c.l.b16 %v880
    %v918 = vunpack.c.l.b16 %v881
    %v919 = vunpack.c.l.b16 %v882
    %v920 = vunpack.c.l.b16 %v883
    %v921 = vunpack.c.l.b16 %v884
    %v922 = vpack.c.b16 %v907, %v906
    %v923 = vpack.c.b16 %v909, %v908
    %v924 = vpack.c.b16 %v911, %v910
    %v925 = vpack.c.b16 %v913, %v912
    %v926 = vpack.c.b16 %v915, %v914
    %v927 = vpack.c.b16 %v917, %v916
    %v928 = vpack.c.b16 %v919, %v918
    %v929 = vpack.c.b16 %v921, %v920
    %938 = vmatprep.subr.bf16.mxu0 0
    %939 = vmatpush1.bf16.msra.mxu0 %v929
    %940 = vmatprep.subr.bf16.mxu0 0
    %941 = vmatpush1.bf16.msra.mxu0 %v928
    %942 = vmatprep.subr.bf16.mxu0 0
    %943 = vmatpush1.bf16.msra.mxu0 %v927
    %944 = vmatprep.subr.bf16.mxu0 0
    %945 = vmatpush1.bf16.msra.mxu0 %v926
    %946 = vmatprep.subr.bf16.mxu0 0
    %947 = vmatpush1.bf16.msra.mxu0 %v925
    %948 = vmatprep.subr.bf16.mxu0 0
    %949 = vmatpush1.bf16.msra.mxu0 %v924
    %950 = vmatprep.subr.bf16.mxu0 0
    %951 = vmatpush1.bf16.msra.mxu0 %v923
    %952 = vmatprep.subr.bf16.mxu0 0
    %953 = vmatpush1.bf16.msra.mxu0 %v922
    %954 = vmatprep.subr.bf16.mxu0 0
    %955 = vmatpush2.bf16.msra.mxu0 0
    %956 = vmatprep.subr.bf16.mxu0 0
    %957 = vmatpush2.bf16.msra.mxu0 0
    %958 = vmatprep.subr.bf16.mxu0 0
    %959 = vmatpush2.bf16.msra.mxu0 0
    %960 = vmatprep.subr.bf16.mxu0 0
    %961 = vmatpush2.bf16.msra.mxu0 0
    %962 = vmatprep.subr.bf16.mxu0 0
    %963 = vmatpush2.bf16.msra.mxu0 0
    %964 = vmatprep.subr.bf16.mxu0 0
    %965 = vmatpush2.bf16.msra.mxu0 0
    %966 = vmatprep.subr.bf16.mxu0 0
    %967 = vmatpush2.bf16.msra.mxu0 0
    %968 = vmatprep.subr.bf16.mxu0 0
    %969 = vmatpush2.bf16.msra.mxu0 0
    %970 = vmatprep.mubr.bf16.mxu0 0
    %971 = vmatmul.mubr.bf16.gmra.mxu0 %v867
    %v972 = vpop.f32.mrf.mxu0
    %v973 = vadd.f32 %v889, %v972
    %v974 = vpop.f32.mrf.mxu0
    %v975 = vpop.f32.mrf.mxu0
    %v976 = vadd.f32 %v889, %v975
    %v977 = vpop.f32.mrf.mxu0
    %978 = vmatprep.mubr.bf16.mxu0 0
    %979 = vmatmul.mubr.bf16.gmra.mxu0 %v868
    %v980 = vpop.f32.mrf.mxu0
    %v981 = vadd.f32 %v889, %v980
    %v982 = vpop.f32.mrf.mxu0
    %v983 = vpop.f32.mrf.mxu0
    %v984 = vpop.f32.mrf.mxu0
    %985 = vdwg.mxu0
    %v986 = vadd.f32 %v973, %v742
    %v987 = vadd.f32 %v976, %v743
    %v988 = vadd.f32 %v981, %v744
    %v989 = vmax.f32 %v986, 0.0
    %v990 = vmax.f32 %v987, 0.0
    %v991 = vmax.f32 %v988, 0.0
    %v992 = vpack.c.bf16 %v990, %v989
    %v993 = vpack.c.bf16 %v991, %v991
    %v994 = vld [vmem:[#allocation2 + $0x1c] sm:$0xf]
    %v995 = vld [vmem:[#allocation2 + $0x3c] sm:$0xf]
    %v996 = vld [vmem:[#allocation2 + $0x5c] sm:$0xf]
    %v997 = vld [vmem:[#allocation2 + $0x7c] sm:$0xf]
    %v998 = vld [vmem:[#allocation2 + $0x9c] sm:$0xf]
    %v999 = vld [vmem:[#allocation2 + $0xbc] sm:$0xf]
    %v1000 = vld [vmem:[#allocation2 + $0xdc] sm:$0xf]
    %v1001 = vld [vmem:[#allocation2 + $0xfc] sm:$0xf]
    %v1002 = vld [vmem:[#allocation2 + $0x11c] sm:$0xf]
    %v1003 = vld [vmem:[#allocation2 + $0x13c] sm:$0xf]
    %v1004 = vld [vmem:[#allocation2 + $0x15c] sm:$0xf]
    %v1005 = vld [vmem:[#allocation2 + $0x17c] sm:$0xf]
    %v1006 = vld [vmem:[#allocation2 + $0x19c] sm:$0xf]
    %v1007 = vld [vmem:[#allocation2 + $0x1bc] sm:$0xf]
    %v1008 = vld [vmem:[#allocation2 + $0x1dc] sm:$0xf]
    %v1009 = vld [vmem:[#allocation2 + $0x1fc] sm:$0xf]
    %v1010 = vld [vmem:[%s3 + $0x9] sm:$0x1]
    %v1011 = vlaneseq
    %v1012 = vshrl.u32 %v1011, 7
    %v1013 = vsub.s32 0, %v1012
    %v1014 = vrot.slane %v1010, %v1013
    %v1031 = vunpack.c.l.b16 %v994
    %v1032 = vunpack.c.l.b16 %v995
    %v1033 = vunpack.c.l.b16 %v996
    %v1034 = vunpack.c.l.b16 %v997
    %v1035 = vunpack.c.l.b16 %v998
    %v1036 = vunpack.c.l.b16 %v999
    %v1037 = vunpack.c.l.b16 %v1000
    %v1038 = vunpack.c.l.b16 %v1001
    %v1039 = vunpack.c.l.b16 %v1002
    %v1040 = vunpack.c.l.b16 %v1003
    %v1041 = vunpack.c.l.b16 %v1004
    %v1042 = vunpack.c.l.b16 %v1005
    %v1043 = vunpack.c.l.b16 %v1006
    %v1044 = vunpack.c.l.b16 %v1007
    %v1045 = vunpack.c.l.b16 %v1008
    %v1046 = vunpack.c.l.b16 %v1009
    %v1047 = vpack.c.b16 %v1032, %v1031
    %v1048 = vpack.c.b16 %v1034, %v1033
    %v1049 = vpack.c.b16 %v1036, %v1035
    %v1050 = vpack.c.b16 %v1038, %v1037
    %v1051 = vpack.c.b16 %v1040, %v1039
    %v1052 = vpack.c.b16 %v1042, %v1041
    %v1053 = vpack.c.b16 %v1044, %v1043
    %v1054 = vpack.c.b16 %v1046, %v1045
    %1063 = vmatprep.subr.bf16.mxu0 0
    %1064 = vmatpush1.bf16.msra.mxu0 %v1054
    %1065 = vmatprep.subr.bf16.mxu0 0
    %1066 = vmatpush1.bf16.msra.mxu0 %v1053
    %1067 = vmatprep.subr.bf16.mxu0 0
    %1068 = vmatpush1.bf16.msra.mxu0 %v1052
    %1069 = vmatprep.subr.bf16.mxu0 0
    %1070 = vmatpush1.bf16.msra.mxu0 %v1051
    %1071 = vmatprep.subr.bf16.mxu0 0
    %1072 = vmatpush1.bf16.msra.mxu0 %v1050
    %1073 = vmatprep.subr.bf16.mxu0 0
    %1074 = vmatpush1.bf16.msra.mxu0 %v1049
    %1075 = vmatprep.subr.bf16.mxu0 0
    %1076 = vmatpush1.bf16.msra.mxu0 %v1048
    %1077 = vmatprep.subr.bf16.mxu0 0
    %1078 = vmatpush1.bf16.msra.mxu0 %v1047
    %1079 = vmatprep.subr.bf16.mxu0 0
    %1080 = vmatpush2.bf16.msra.mxu0 0
    %1081 = vmatprep.subr.bf16.mxu0 0
    %1082 = vmatpush2.bf16.msra.mxu0 0
    %1083 = vmatprep.subr.bf16.mxu0 0
    %1084 = vmatpush2.bf16.msra.mxu0 0
    %1085 = vmatprep.subr.bf16.mxu0 0
    %1086 = vmatpush2.bf16.msra.mxu0 0
    %1087 = vmatprep.subr.bf16.mxu0 0
    %1088 = vmatpush2.bf16.msra.mxu0 0
    %1089 = vmatprep.subr.bf16.mxu0 0
    %1090 = vmatpush2.bf16.msra.mxu0 0
    %1091 = vmatprep.subr.bf16.mxu0 0
    %1092 = vmatpush2.bf16.msra.mxu0 0
    %1093 = vmatprep.subr.bf16.mxu0 0
    %1094 = vmatpush2.bf16.msra.mxu0 0
    %1095 = vmatprep.mubr.bf16.mxu0 0
    %1096 = vmatmul.mubr.bf16.gmra.mxu0 %v992
    %v1097 = vpop.f32.mrf.mxu0
    %v1098 = vadd.f32 %v1014, %v1097
    %v1099 = vpop.f32.mrf.mxu0
    %v1100 = vpop.f32.mrf.mxu0
    %v1101 = vadd.f32 %v1014, %v1100
    %v1102 = vpop.f32.mrf.mxu0
    %1103 = vmatprep.mubr.bf16.mxu0 0
    %1104 = vmatmul.mubr.bf16.gmra.mxu0 %v993
    %v1105 = vpop.f32.mrf.mxu0
    %v1106 = vadd.f32 %v1014, %v1105
    %v1107 = vpop.f32.mrf.mxu0
    %v1108 = vpop.f32.mrf.mxu0
    %v1109 = vpop.f32.mrf.mxu0
    %1110 = vdwg.mxu0
    %v1111 = vand.u32 2147483647, %v1098
    %v1112 = vand.u32 2147483647, %v1101
    %v1113 = vand.u32 2147483647, %v1106
    %1114 = vst [vmem:[%s4] sm:$0xff] %v1111
    %1115 = vst [vmem:[%s4 + $0x8] sm:$0xff] %v1112
    %1116 = vst [vmem:[%s4 + $0x10] sm:$0xff] %v1113
    // Predicated region
    $region22: #{hook_phynet_forward.1} parent=1 // pred_check
      _
    $region23: #{hook_phynet_forward.1} parent=1 // pred_check_branch
      %1118 = sbr.rel (0) target = $region25
    $region24: #{hook_phynet_forward.1} parent=1 // pred_region
      _
    $region25: #{hook_phynet_forward.1} parent=1 // pred_fallthru
      _
    // Predicated region
    $region26: #{hook_phynet_forward.1} parent=1 // pred_check
      _
    $region27: #{hook_phynet_forward.1} parent=1 // pred_check_branch
      %1120 = sbr.rel (0) target = $region29
    $region28: #{hook_phynet_forward.1} parent=1 // pred_region
      _
    $region29: #{hook_phynet_forward.1} parent=1 // pred_fallthru
      _
    %1121 = vsyncpa [#allocation3], 1

</llo_original>
